<compile_context>
chip_gen: v7x
topology: tpu7x:2x2x1
jax: 0.10.0
libtpu: 0.0.40
codegen_flags: <defaults>
</compile_context>

<pallas_src>
import math

import jax
import jax.numpy as jnp
from jax.experimental import pallas as pl
from jax.experimental.pallas import tpu as pltpu

# -------------------- small deterministic configuration --------------------
BATCH = 2
IN_CHANNELS = 4
OUT_CHANNELS = 8
H = W = 16
GROUP_SAMPLES = 4      # base_group_config.no_samples (SO(2) lifting samples)
KERNEL_SIZE = 7        # kernel_config.size (odd)
PADDING = 3            # conv_config.padding
SIREN_HIDDEN = 32      # kernel_config.no_hidden
SIREN_LAYERS = 3       # kernel_config.no_layers
SIREN_OMEGA0 = 10.0    # kernel_config.omega0

LANE = 128
KKC_ALIGN = 256        # contraction dim padded to a full 256-wide MXU chunk (v6e/v7x)


def _round_up(v, m):
    return (v + m - 1) // m * m


# -------------------- group / kernel-net glue (plain JAX, precomputed) --------------------
def rel_positions_grid(k):
    """g_utils.rel_positions_grid for dimension_Rd = 2 -> [2, k, k] in [-1, 1]."""
    lin = jnp.linspace(-1.0, 1.0, k, dtype=jnp.float32)
    gy, gx = jnp.meshgrid(lin, lin, indexing="ij")
    return jnp.stack([gy, gx], axis=0)


def sample_from_stabilizer_so2(no_samples, no_elements):
    """Deterministic 'discretise' sampling of SO(2): equispaced angles in [0, 2*pi)."""
    thetas = jnp.arange(no_elements, dtype=jnp.float32) * (2.0 * math.pi / no_elements)
    return jnp.broadcast_to(thetas[None, :], (no_samples, no_elements))


def left_action_on_Rd(thetas, rel_pos):
    """Rotate the R^2 grid by each angle. thetas: [G], rel_pos: [2, k, k] -> [G, 2, k, k]."""
    c, s = jnp.cos(thetas), jnp.sin(thetas)
    R = jnp.stack([jnp.stack([c, -s], -1), jnp.stack([s, c], -1)], -2)  # [G, 2, 2]
    return jnp.einsum("gij,jhw->gihw", R, rel_pos)


def init_siren_params(key, dim_in, hidden, out_ch, no_layers, omega0):
    dims = [dim_in] + [hidden] * no_layers + [out_ch]
    params = []
    for i, (d_in, d_out) in enumerate(zip(dims[:-1], dims[1:])):
        key, kw, kb = jax.random.split(key, 3)
        bound = (1.0 / d_in) if i == 0 else (math.sqrt(6.0 / d_in) / omega0)
        Wm = jax.random.uniform(kw, (d_in, d_out), minval=-bound, maxval=bound,
                                dtype=jnp.float32)
        bm = jax.random.uniform(kb, (d_out,), minval=-bound, maxval=bound,
                                dtype=jnp.float32)
        params.append((Wm, bm))
    return params


def siren_apply(params, coords, omega0):
    """Pointwise SIREN: sine hidden layers, linear readout."""
    h = coords
    *hidden_layers, (Wl, bl) = params
    for (Wi, bi) in hidden_layers:
        h = jnp.sin(omega0 * (h @ Wi + bi))
    return h @ Wl + bl


def generate_conv_kernel(siren_params):
    """Returns (weight [G*Cout, Cin, k, k] in OIHW, g_elems [1, G])."""
    k, G = KERNEL_SIZE, GROUP_SAMPLES
    rel_pos = rel_positions_grid(k)                                   # [2, k, k]
    g_elems = sample_from_stabilizer_so2(1, G)                        # [1, G]
    # group.inv for SO(2) is negation; act on the Rd grid.
    acted_rel_pos = left_action_on_Rd(-g_elems.reshape(-1), rel_pos)  # [G, 2, k, k]

    coords = acted_rel_pos.transpose(0, 2, 3, 1).reshape(-1, 2)       # [G*k*k, 2]
    kvals = siren_apply(siren_params, coords, SIREN_OMEGA0)           # [G*k*k, Cout*Cin]
    conv_kernel = kvals.reshape(G, k, k, OUT_CHANNELS * IN_CHANNELS)
    conv_kernel = conv_kernel.transpose(0, 3, 1, 2).reshape(
        G, OUT_CHANNELS, IN_CHANNELS, k, k)

    # circular mask: zero kernel values whose rotated position lies outside the unit disk
    norm = jnp.sqrt(jnp.sum(acted_rel_pos[:, :2] ** 2, axis=1))       # [G, k, k]
    conv_kernel = jnp.where((norm > 1.0)[:, None, None, :, :], 0.0, conv_kernel)

    weight = conv_kernel.reshape(G * OUT_CHANNELS, IN_CHANNELS, k, k)  # OIHW
    return weight, g_elems


def prepare_lifting_conv(siren_params, bias):
    """One-time (per parameter set) kernel-net eval + weight/bias re-layout.

    Hoisted out of the per-forward hot path: the conv kernel does not depend on x.
    Weight rows are permuted to (co*G + g) so the Pallas output is already in the
    module's [B, Cout, G, Ho, Wo] order (no post-kernel transpose copy), and the
    contraction columns are zero-padded to KKC_ALIGN for clean MXU feed.
    """
    weight, g_elems = generate_conv_kernel(siren_params)             # [O, Cin, K, K]
    O, Cin, K, _ = weight.shape
    ckk = Cin * K * K
    kkc_pad = _round_up(ckk, KKC_ALIGN)

    # Column ordering c*K*K + kh*K + kw (natural OIHW flatten) matches the im2col slab.
    w_rows = weight.reshape(GROUP_SAMPLES, OUT_CHANNELS, ckk)         # row g*Cout+co
    w_slab = jnp.transpose(w_rows, (1, 0, 2)).reshape(O, ckk)         # row co*G+g
    w_slab = jnp.pad(w_slab, ((0, 0), (0, kkc_pad - ckk)))            # zero contraction pad

    # Per-output-row bias (row co*G + g -> bias[co]), fused in-kernel.
    bias_rows = jnp.repeat(bias.reshape(-1), GROUP_SAMPLES).reshape(O, 1)
    return w_slab, bias_rows, g_elems


# -------------------- Pallas conv2d (the hot path) --------------------
def _lifting_matmul_kernel(a_ref, w_ref, b_ref, o_ref):
    # a_ref : (1, KKCp, M)  im2col slab for one image (one aligned DMA per grid step)
    # w_ref : (O, KKCp)     weight slab, resident across the batch grid (constant map)
    # b_ref : (O, 1)        per-output-row bias (fused into the store)
    # o_ref : (1, O, M)     lane-dense output block (M multiple of 128, unmasked vst)
    o_ref[0] = (jnp.dot(w_ref[...], a_ref[0], preferred_element_type=jnp.float32)
                + b_ref[...])


def pallas_lifting_conv(x, w_slab, bias_rows, padding, kernel_size):
    """conv2d(x, weight, padding) + bias. x: [B, Cin, H, W] -> [B, O, Ho, Wo]."""
    B, Cin, Hin, Win = x.shape
    O, KKCp = w_slab.shape
    K = kernel_size
    Ho, Wo = Hin + 2 * padding - K + 1, Win + 2 * padding - K + 1
    M = _round_up(Ho * Wo, LANE)          # lane-dense output positions per image

    # im2col slab in the XLA wrapper: at this size (~0.25 MB/image) one aligned DMA
    # per grid step is far cheaper than in-kernel unaligned slices / masked stores.
    # Row index = c*K*K + kh*K + kw, column index = ho*Wo + wo.
    x_pad = jnp.pad(x, ((0, 0), (0, 0), (padding, padding), (padding, padding)))
    patches = jnp.stack(
        [x_pad[:, :, kh:kh + Ho, kw:kw + Wo]
         for kh in range(K) for kw in range(K)], axis=2)        # (B, Cin, K*K, Ho, Wo)
    a = patches.reshape(B, Cin * K * K, Ho * Wo)
    a = jnp.pad(a, ((0, 0), (0, KKCp - Cin * K * K), (0, M - Ho * Wo)))   # (B, KKCp, M)

    # NOTE: for larger H*W, add an M-tiling grid axis so the (KKCp, M_tile) A block
    # stays bounded against v7x's 64 MiB VMEM; at M=256 the block is ~0.25 MB.
    out_t = pl.pallas_call(
        _lifting_matmul_kernel,
        out_shape=jax.ShapeDtypeStruct((B, O, M), jnp.float32),
        grid_spec=pltpu.PrefetchScalarGridSpec(
            num_scalar_prefetch=0,
            grid=(B,),
            in_specs=[
                pl.BlockSpec((1, KKCp, M), lambda b: (b, 0, 0)),     # one DMA / image
                pl.BlockSpec((O, KKCp), lambda b: (0, 0)),           # resident weights
                pl.BlockSpec((O, 1), lambda b: (0, 0)),              # resident bias
            ],
            out_specs=pl.BlockSpec((1, O, M), lambda b: (b, 0, 0)),
        ),
        compiler_params=pltpu.CompilerParams(
            dimension_semantics=("parallel",)),                      # 2 TCs on v7x
    )(a, w_slab, bias_rows)

    out = out_t[:, :, :Ho * Wo].reshape(B, O, Ho, Wo)                # [B, O, Ho, Wo]
    return out


# -------------------- full LiftingConv forward --------------------
def lifting_conv_forward(x, w_slab, bias_rows, g_elems):
    """x: [B, Cin, H, W] -> (out [B, Cout, G, Ho, Wo], g_elems [1, G])."""
    out4 = pallas_lifting_conv(x, w_slab, bias_rows, PADDING, KERNEL_SIZE)
    B, O, Ho, Wo = out4.shape
    # Weight rows were pre-ordered (co*G + g): this reshape IS the torch
    # view(B, G, Cout, Ho, Wo).transpose(1, 2); bias already fused in-kernel.
    out = out4.reshape(B, OUT_CHANNELS, GROUP_SAMPLES, Ho, Wo)
    return out, g_elems


def reference_forward(x, siren_params, bias):
    """Pure-JAX reference mirroring torch.nn.functional.conv2d semantics."""
    weight, g_elems = generate_conv_kernel(siren_params)
    out = jax.lax.conv_general_dilated(
        x, weight, window_strides=(1, 1),
        padding=[(PADDING, PADDING), (PADDING, PADDING)],
        dimension_numbers=("NCHW", "OIHW", "NCHW"),
        precision=jax.lax.Precision.HIGHEST)
    B = x.shape[0]
    Ho, Wo = out.shape[-2:]
    out = out.reshape(B, GROUP_SAMPLES, OUT_CHANNELS, Ho, Wo).transpose(0, 2, 1, 3, 4)
    return out + bias.reshape(1, -1, 1, 1, 1), g_elems


# -------------------- main --------------------
if __name__ == "__main__":
    key = jax.random.PRNGKey(0)
    kx, kp, kb = jax.random.split(key, 3)

    x = jax.random.normal(kx, (BATCH, IN_CHANNELS, H, W), dtype=jnp.float32)
    siren_params = init_siren_params(
        kp, dim_in=2, hidden=SIREN_HIDDEN,
        out_ch=OUT_CHANNELS * IN_CHANNELS,
        no_layers=SIREN_LAYERS, omega0=SIREN_OMEGA0)
    # conv_config.bias = True (small non-zero values so the fused bias path is exercised)
    bias = 0.1 * jax.random.normal(kb, (1, OUT_CHANNELS), dtype=jnp.float32)

    # SIREN eval + weight re-layout done once, outside the per-forward hot path.
    w_slab, bias_rows, g_elems = prepare_lifting_conv(siren_params, bias)

    fwd = jax.jit(lifting_conv_forward)
    out, g_out = fwd(x, w_slab, bias_rows, g_elems)
    jax.block_until_ready(out)

    ref_out, ref_g = reference_forward(x, siren_params, bias)
    jax.block_until_ready(ref_out)

    assert out.shape == (BATCH, OUT_CHANNELS, GROUP_SAMPLES, H, W), out.shape
    assert g_out.shape == (1, GROUP_SAMPLES), g_out.shape
    assert jnp.allclose(g_out, ref_g), "stabilizer samples mismatch"
    assert jnp.allclose(out, ref_out, rtol=2e-3, atol=2e-3), (
        float(jnp.max(jnp.abs(out - ref_out))))

    print("KERNEL_OK")
</pallas_src>

<mosaic_0001>
module attributes {stable_mosaic.version = 11 : i64} {
  func.func @_lifting_matmul_kernel(%arg0: i32, %arg1: memref<1x256x256xf32, #tpu.memory_space<vmem>>, %arg2: memref<32x256xf32, #tpu.memory_space<vmem>>, %arg3: memref<32x1xf32, #tpu.memory_space<vmem>>, %arg4: memref<1x32x256xf32, #tpu.memory_space<vmem>>) attributes {dimension_semantics = [#tpu.dimension_semantics<parallel>], iteration_bounds = array<i64: 2>, scalar_prefetch = 0 : i64, scratch_operands = 0 : i64, tpu.core_type = #tpu.core_type<tc>, window_params = [{transform_indices = @transform_0, window_bounds = array<i64: 1, 256, 256>}, {pipeline_mode = #tpu.pipeline_mode<synchronous>, transform_indices = @transform_1, window_bounds = array<i64: 32, 256>}, {pipeline_mode = #tpu.pipeline_mode<synchronous>, transform_indices = @transform_2, window_bounds = array<i64: 32, 1>}, {transform_indices = @transform_3, window_bounds = array<i64: 1, 32, 256>}]} {
    %c0 = arith.constant 0 : index
    %c0_0 = arith.constant 0 : index
    %0 = vector.load %arg2[%c0, %c0_0] : memref<32x256xf32, #tpu.memory_space<vmem>>, vector<32x256xf32>
    %c0_1 = arith.constant 0 : index
    %c0_2 = arith.constant 0 : index
    %c0_3 = arith.constant 0 : index
    %1 = vector.load %arg1[%c0_1, %c0_2, %c0_3] : memref<1x256x256xf32, #tpu.memory_space<vmem>>, vector<1x256x256xf32>
    %2 = vector.shape_cast %1 : vector<1x256x256xf32> to vector<256x256xf32>
    %cst = arith.constant dense<0.000000e+00> : vector<32x256xf32>
    %3 = tpu.matmul %0, %2, %cst {dimension_numbers = #tpu.dot_dimension_numbers<[1], [0], [0], [1], [0, 0, 1, 1], [], []>} : vector<32x256xf32>, vector<256x256xf32>, vector<32x256xf32> -> vector<32x256xf32>
    %c0_4 = arith.constant 0 : index
    %c0_5 = arith.constant 0 : index
    %4 = vector.load %arg3[%c0_4, %c0_5] : memref<32x1xf32, #tpu.memory_space<vmem>>, vector<32x1xf32>
    %5 = vector.broadcast %4 : vector<32x1xf32> to vector<32x256xf32>
    %6 = arith.addf %3, %5 : vector<32x256xf32>
    %c0_6 = arith.constant 0 : index
    %c0_7 = arith.constant 0 : index
    %c0_8 = arith.constant 0 : index
    %7 = vector.load %arg4[%c0_6, %c0_7, %c0_8] : memref<1x32x256xf32, #tpu.memory_space<vmem>>, vector<1x32x256xf32>
    %8 = vector.shape_cast %7 : vector<1x32x256xf32> to vector<32x256xf32>
    %9 = vector.shape_cast %6 : vector<32x256xf32> to vector<1x32x256xf32>
    tpu.vector_store %arg4[%c0_6, %c0_7, %c0_8], %9 {strides = array<i32>} : memref<1x32x256xf32, #tpu.memory_space<vmem>>, vector<1x32x256xf32>,
    return
  }
  func.func @transform_0(%arg0: i32) -> (i32, i32, i32) {
    %c0_i32 = arith.constant 0 : i32
    %c0_i32_0 = arith.constant 0 : i32
    %c0_i32_1 = arith.constant 0 : i32
    return %arg0, %c0_i32, %c0_i32_0 : i32, i32, i32
  }
  func.func @transform_1(%arg0: i32) -> (i32, i32) {
    %c0_i32 = arith.constant 0 : i32
    %c0_i32_0 = arith.constant 0 : i32
    %c0_i32_1 = arith.constant 0 : i32
    return %c0_i32, %c0_i32_0 : i32, i32
  }
  func.func @transform_2(%arg0: i32) -> (i32, i32) {
    %c0_i32 = arith.constant 0 : i32
    %c0_i32_0 = arith.constant 0 : i32
    %c0_i32_1 = arith.constant 0 : i32
    return %c0_i32, %c0_i32_0 : i32, i32
  }
  func.func @transform_3(%arg0: i32) -> (i32, i32, i32) {
    %c0_i32 = arith.constant 0 : i32
    %c0_i32_0 = arith.constant 0 : i32
    %c0_i32_1 = arith.constant 0 : i32
    return %arg0, %c0_i32, %c0_i32_0 : i32, i32, i32
  }
}

</mosaic_0001>

<llo_original>
// kernel: lifting_conv_forward.1
$region0: #{lifting_conv_forward.1}
  #allocation0 [shape = 'u32[]', space=smem, size = 0x4, offset = 0x4, fixed_abs, tag = 'smem constant byte address 0x4 - core index']
  #allocation1 [shape = 'u32[144,128]{1,0:T(1,128)}', space=vmem, size = 0x12000, scoped, tag = 'internal scratch']
  %s0 = inlined_call_operand.vmem [shape: f32[2,256,256], index: 0, kind: input, shape index: {}]
  %s1 = inlined_call_operand.vmem [shape: f32[32,256], index: 1, kind: input, shape index: {}]
  %s2 = inlined_call_operand.vmem [shape: f32[32,1], index: 2, kind: input, shape index: {}]
  %s3 = inlined_call_operand.vmem [shape: f32[2,32,256], index: 3, kind: output, shape index: {}]
  %s4 = sld [smem:[#allocation0]]
  $region45: #{lifting_conv_forward.1} parent=0
    _
  %s6 = ssub.s32 1, %s4
  %s7 = scalar_select 0, %s6, %s4
  loop: start=0, step=1, limit=4
  $region2: #{lifting_conv_forward.1} parent=0 // loop_pre_header
    _
  $region3: #{lifting_conv_forward.1} parent=0 // loop_header
    %s9 = sphi 0, %s13
    %p10 = scmp.ge.s32.totalorder %s9, 4
    %s19 = sphi 0, %s21
    %s22 = sphi 0, %s19
    %s23 = sphi 0, %s22
    %s39 = sphi 0, %s23
    %s43 = sphi 0, %s43
    %s45 = sphi 0, %s43
    %s46 = sphi 0, %s45
    %s60 = sphi 0, %s46
    %s64 = sphi 0, %s64
    %s66 = sphi 0, %s64
    %s67 = sphi 0, %s66
    %s81 = sphi 0, %s67
    %s87 = sphi 0, %s89
    %s90 = sphi 0, %s87
    %s91 = sphi 0, %s90
    %s107 = sphi 0, %s91
  $region4: #{lifting_conv_forward.1} parent=0 // loop_header_branch
    %12 = sbr.rel (%p10) target = $region8
  $region5: #{lifting_conv_forward.1} parent=0 // loop_body
    %s14 = ssub.s32 %s9, 1
    %s15 = ssub.s32 %s9, 2
    %s16 = sadd.s32 %s9, 1
    %s17 = ssub.s32 %s9, %s16
    %p18 = scmp.eq.s32.totalorder %s17, 0
    %s20 = sadd.s32 %s19, 1
    %s21 = scalar_select %p18, %s19, %s20
    %p24 = pneg %p18
    %p25 = scmp.eq.s32.totalorder %s9, 1
    %p26 = por %p24, %p25
    %p27 = scmp.ne.s32.totalorder %s19, %s22
    %p28 = scmp.eq.s32.totalorder %s9, 0
    %p29 = por %p27, %p28
    %p30 = scmp.ne.s32.totalorder %s19, %s22
    %p31 = scmp.eq.s32.totalorder %s14, 1
    %p32 = por %p30, %p31
    %p33 = scmp.ne.s32.totalorder %s22, %s23
    %p34 = scmp.eq.s32.totalorder %s14, 0
    %p35 = por %p33, %p34
    %p36 = scmp.ne.s32.totalorder %s22, %s23
    %p37 = scmp.eq.s32.totalorder %s15, 1
    %p38 = por %p36, %p37
    %p40 = scmp.ne.s32.totalorder %s23, %s39
    %p41 = scmp.eq.s32.totalorder %s15, 0
    %p42 = por %p40, %p41
    %s44 = sadd.s32 %s43, 1
    %p47 = scmp.eq.s32.totalorder %s9, 1
    %p48 = scmp.ne.s32.totalorder %s43, %s45
    %p49 = scmp.eq.s32.totalorder %s9, 0
    %p50 = por %p48, %p49
    %p51 = scmp.ne.s32.totalorder %s43, %s45
    %p52 = scmp.eq.s32.totalorder %s14, 1
    %p53 = por %p51, %p52
    %p54 = scmp.ne.s32.totalorder %s45, %s46
    %p55 = scmp.eq.s32.totalorder %s14, 0
    %p56 = por %p54, %p55
    %p57 = scmp.ne.s32.totalorder %s45, %s46
    %p58 = scmp.eq.s32.totalorder %s15, 1
    %p59 = por %p57, %p58
    %p61 = scmp.ne.s32.totalorder %s46, %s60
    %p62 = scmp.eq.s32.totalorder %s15, 0
    %p63 = por %p61, %p62
    %s65 = sadd.s32 %s64, 1
    %p68 = scmp.eq.s32.totalorder %s9, 1
    %p69 = scmp.ne.s32.totalorder %s64, %s66
    %p70 = scmp.eq.s32.totalorder %s9, 0
    %p71 = por %p69, %p70
    %p72 = scmp.ne.s32.totalorder %s64, %s66
    %p73 = scmp.eq.s32.totalorder %s14, 1
    %p74 = por %p72, %p73
    %p75 = scmp.ne.s32.totalorder %s66, %s67
    %p76 = scmp.eq.s32.totalorder %s14, 0
    %p77 = por %p75, %p76
    %p78 = scmp.ne.s32.totalorder %s66, %s67
    %p79 = scmp.eq.s32.totalorder %s15, 1
    %p80 = por %p78, %p79
    %p82 = scmp.ne.s32.totalorder %s67, %s81
    %p83 = scmp.eq.s32.totalorder %s15, 0
    %p84 = por %p82, %p83
    %s85 = ssub.s32 %s9, %s16
    %p86 = scmp.eq.s32.totalorder %s85, 0
    %s88 = sadd.s32 %s87, 1
    %s89 = scalar_select %p86, %s87, %s88
    %p92 = pneg %p86
    %p93 = scmp.eq.s32.totalorder %s9, 1
    %p94 = por %p92, %p93
    %p95 = scmp.ne.s32.totalorder %s87, %s90
    %p96 = scmp.eq.s32.totalorder %s9, 0
    %p97 = por %p95, %p96
    %p98 = scmp.ne.s32.totalorder %s87, %s90
    %p99 = scmp.eq.s32.totalorder %s14, 1
    %p100 = por %p98, %p99
    %p101 = scmp.ne.s32.totalorder %s90, %s91
    %p102 = scmp.eq.s32.totalorder %s14, 0
    %p103 = por %p101, %p102
    %p104 = scmp.ne.s32.totalorder %s90, %s91
    %p105 = scmp.eq.s32.totalorder %s15, 1
    %p106 = por %p104, %p105
    %p108 = scmp.ne.s32.totalorder %s91, %s107
    %p109 = scmp.eq.s32.totalorder %s15, 0
    %p110 = por %p108, %p109
    %p111 = scmp.le.s32.totalorder 1, %s9
    %p112 = scmp.lt.s32.totalorder %s9, 3
    %p113 = pnand %p111, %p112
    %p114 = pneg %p113
    // Predicated region
    $region9: #{lifting_conv_forward.1} parent=5 // pred_check
      _
    $region10: #{lifting_conv_forward.1} parent=5 // pred_check_branch
      %116 = sbr.rel (%p113) target = $region12
    $region11: #{lifting_conv_forward.1} parent=5 // pred_region
      %s117 = ssub.s32 %s9, 1
      // Predicated region
      $region13: #{lifting_conv_forward.1} parent=11 // pred_check
        %p118 = pneg %p56
      $region14: #{lifting_conv_forward.1} parent=11 // pred_check_branch
        %120 = sbr.rel (%p118) target = $region16
      $region15: #{lifting_conv_forward.1} parent=11 // pred_region
        _
      $region16: #{lifting_conv_forward.1} parent=11 // pred_fallthru
        _
      // Predicated region
      $region17: #{lifting_conv_forward.1} parent=11 // pred_check
        %p121 = pneg %p77
      $region18: #{lifting_conv_forward.1} parent=11 // pred_check_branch
        %123 = sbr.rel (%p121) target = $region20
      $region19: #{lifting_conv_forward.1} parent=11 // pred_region
        _
      $region20: #{lifting_conv_forward.1} parent=11 // pred_fallthru
        _
    $region12: #{lifting_conv_forward.1} parent=5 // pred_fallthru
      _
    %p124 = scmp.lt.s32.totalorder %s9, 2
    // Predicated region
    $region21: #{lifting_conv_forward.1} parent=5 // pred_check
      %p125 = pneg %p124
    $region22: #{lifting_conv_forward.1} parent=5 // pred_check_branch
      %127 = sbr.rel (%p125) target = $region24
    $region23: #{lifting_conv_forward.1} parent=5 // pred_region
      // Predicated region
      $region25: #{lifting_conv_forward.1} parent=23 // pred_check
        %p128 = pneg %p29
      $region26: #{lifting_conv_forward.1} parent=23 // pred_check_branch
        %130 = sbr.rel (%p128) target = $region28
      $region27: #{lifting_conv_forward.1} parent=23 // pred_region
        %p131 = scmp.lt.s32.totalorder %s9, 1
        %s132 = scalar_select %p131, %s9, 1
        %s133 = smul.addr %s132, 64
        %s134 = smul.addr %s133, 8
        %s135 = scalar_lea.vmem %s0, %s134
      $region28: #{lifting_conv_forward.1} parent=23 // pred_fallthru
        _
    $region24: #{lifting_conv_forward.1} parent=5 // pred_fallthru
      _
    %p136 = scmp.le.s32.totalorder 1, %s9
    %p137 = scmp.lt.s32.totalorder %s9, 3
    %p138 = pnand %p136, %p137
    %p139 = pneg %p138
    // Predicated region
    $region29: #{lifting_conv_forward.1} parent=5 // pred_check
      _
    $region30: #{lifting_conv_forward.1} parent=5 // pred_check_branch
      %141 = sbr.rel (%p138) target = $region32
    $region31: #{lifting_conv_forward.1} parent=5 // pred_region
      %s142 = ssub.s32 %s9, 1
      %p143 = scmp.lt.s32.totalorder %s14, 1
      %s144 = scalar_select %p143, %s14, 1
      %s145 = smul.addr %s144, 64
      %s146 = smul.addr %s145, 8
      %s147 = scalar_lea.vmem %s0, %s146
      %p148 = pneg %p35
      %p149 = pneg %p32
      %p150 = pneg %p56
      %p151 = pneg %p53
      %p152 = pneg %p77
      %p153 = pneg %p74
      %p154 = pneg %p103
      %p155 = pneg %p100
      %p156 = scmp.lt.s32.totalorder %s14, 1
      %s157 = scalar_select %p156, %s14, 1
      %s158 = smul.addr %s157, 8
      %s159 = smul.addr %s158, 8
      %s160 = scalar_lea.vmem %s3, %s159
      %p161 = scmp.lt.s32.totalorder %s14, 1
      %s162 = scalar_select %p161, %s14, 1
      %s163 = smul.addr %s162, 64
      %s164 = smul.addr %s163, 8
      %s165 = scalar_lea.vmem %s0, %s164
      %p166 = scmp.lt.s32.totalorder %s14, 1
      %s167 = scalar_select %p166, %s14, 1
      %s168 = smul.addr %s167, 8
      %s169 = smul.addr %s168, 8
      %s170 = scalar_lea.vmem %s3, %s169
      %v171 = vld [vmem:[%s1] sm:$0xff]
      %v172 = vld [vmem:[%s1 + $0x8] sm:$0xff]
      %v173 = vld [vmem:[%s1 + $0x10] sm:$0xff]
      %v174 = vld [vmem:[%s1 + $0x18] sm:$0xff]
      %v175 = vld [vmem:[%s1 + $0x20] sm:$0xff]
      %v176 = vld [vmem:[%s1 + $0x28] sm:$0xff]
      %v177 = vld [vmem:[%s1 + $0x30] sm:$0xff]
      %v178 = vld [vmem:[%s1 + $0x38] sm:$0xff]
      %v179 = vld [vmem:[%s165] sm:$0xff]
      %v180 = vld [vmem:[%s165 + $0x8] sm:$0xff]
      %v181 = vld [vmem:[%s165 + $0x10] sm:$0xff]
      %v182 = vld [vmem:[%s165 + $0x18] sm:$0xff]
      %v183 = vld [vmem:[%s165 + $0x20] sm:$0xff]
      %v184 = vld [vmem:[%s165 + $0x28] sm:$0xff]
      %v185 = vld [vmem:[%s165 + $0x30] sm:$0xff]
      %v186 = vld [vmem:[%s165 + $0x38] sm:$0xff]
      %v187 = vld [vmem:[%s165 + $0x40] sm:$0xff]
      %v188 = vld [vmem:[%s165 + $0x48] sm:$0xff]
      %v189 = vld [vmem:[%s165 + $0x50] sm:$0xff]
      %v190 = vld [vmem:[%s165 + $0x58] sm:$0xff]
      %v191 = vld [vmem:[%s165 + $0x60] sm:$0xff]
      %v192 = vld [vmem:[%s165 + $0x68] sm:$0xff]
      %v193 = vld [vmem:[%s165 + $0x70] sm:$0xff]
      %v194 = vld [vmem:[%s165 + $0x78] sm:$0xff]
      %v195 = vld [vmem:[%s165 + $0x80] sm:$0xff]
      %v196 = vld [vmem:[%s165 + $0x88] sm:$0xff]
      %v197 = vld [vmem:[%s165 + $0x90] sm:$0xff]
      %v198 = vld [vmem:[%s165 + $0x98] sm:$0xff]
      %v199 = vld [vmem:[%s165 + $0xa0] sm:$0xff]
      %v200 = vld [vmem:[%s165 + $0xa8] sm:$0xff]
      %v201 = vld [vmem:[%s165 + $0xb0] sm:$0xff]
      %v202 = vld [vmem:[%s165 + $0xb8] sm:$0xff]
      %v203 = vld [vmem:[%s165 + $0xc0] sm:$0xff]
      %v204 = vld [vmem:[%s165 + $0xc8] sm:$0xff]
      %v205 = vld [vmem:[%s165 + $0xd0] sm:$0xff]
      %v206 = vld [vmem:[%s165 + $0xd8] sm:$0xff]
      %v207 = vld [vmem:[%s165 + $0xe0] sm:$0xff]
      %v208 = vld [vmem:[%s165 + $0xe8] sm:$0xff]
      %v209 = vld [vmem:[%s165 + $0xf0] sm:$0xff]
      %v210 = vld [vmem:[%s165 + $0xf8] sm:$0xff]
      %v211 = vld [vmem:[%s165 + $0x100] sm:$0xff]
      %v212 = vld [vmem:[%s165 + $0x108] sm:$0xff]
      %v213 = vld [vmem:[%s165 + $0x110] sm:$0xff]
      %v214 = vld [vmem:[%s165 + $0x118] sm:$0xff]
      %v215 = vld [vmem:[%s165 + $0x120] sm:$0xff]
      %v216 = vld [vmem:[%s165 + $0x128] sm:$0xff]
      %v217 = vld [vmem:[%s165 + $0x130] sm:$0xff]
      %v218 = vld [vmem:[%s165 + $0x138] sm:$0xff]
      %v219 = vld [vmem:[%s165 + $0x140] sm:$0xff]
      %v220 = vld [vmem:[%s165 + $0x148] sm:$0xff]
      %v221 = vld [vmem:[%s165 + $0x150] sm:$0xff]
      %v222 = vld [vmem:[%s165 + $0x158] sm:$0xff]
      %v223 = vld [vmem:[%s165 + $0x160] sm:$0xff]
      %v224 = vld [vmem:[%s165 + $0x168] sm:$0xff]
      %v225 = vld [vmem:[%s165 + $0x170] sm:$0xff]
      %v226 = vld [vmem:[%s165 + $0x178] sm:$0xff]
      %v227 = vld [vmem:[%s165 + $0x180] sm:$0xff]
      %v228 = vld [vmem:[%s165 + $0x188] sm:$0xff]
      %v229 = vld [vmem:[%s165 + $0x190] sm:$0xff]
      %v230 = vld [vmem:[%s165 + $0x198] sm:$0xff]
      %v231 = vld [vmem:[%s165 + $0x1a0] sm:$0xff]
      %v232 = vld [vmem:[%s165 + $0x1a8] sm:$0xff]
      %v233 = vld [vmem:[%s165 + $0x1b0] sm:$0xff]
      %v234 = vld [vmem:[%s165 + $0x1b8] sm:$0xff]
      %v235 = vld [vmem:[%s165 + $0x1c0] sm:$0xff]
      %v236 = vld [vmem:[%s165 + $0x1c8] sm:$0xff]
      %v237 = vld [vmem:[%s165 + $0x1d0] sm:$0xff]
      %v238 = vld [vmem:[%s165 + $0x1d8] sm:$0xff]
      %v239 = vld [vmem:[%s165 + $0x1e0] sm:$0xff]
      %v240 = vld [vmem:[%s165 + $0x1e8] sm:$0xff]
      %v241 = vld [vmem:[%s165 + $0x1f0] sm:$0xff]
      %v242 = vld [vmem:[%s165 + $0x1f8] sm:$0xff]
      %v243 = vld [vmem:[%s2] sm:$0xff]
      %v244 = vld [vmem:[%s2 + $0x8] sm:$0xff]
      %v245 = vld [vmem:[%s2 + $0x10] sm:$0xff]
      %v246 = vld [vmem:[%s2 + $0x18] sm:$0xff]
      %248 = vset.pattern.permute.xlu0 0
      %249 = vperm.xlu0 %248, %v243
      %v250 = vpop.permute.xlu0 %249
      %253 = vset.pattern.permute.xlu0 0
      %254 = vperm.xlu0 %253, %v244
      %v255 = vpop.permute.xlu0 %254
      %258 = vset.pattern.permute.xlu0 0
      %259 = vperm.xlu0 %258, %v245
      %v260 = vpop.permute.xlu0 %259
      %263 = vset.pattern.permute.xlu0 0
      %264 = vperm.xlu0 %263, %v246
      %v265 = vpop.permute.xlu0 %264
      %267 = vmatprep.subr.mxu0 %v180
      %268 = vmatpush1.msra.mxu0 %v179
      %269 = vmatprep.subr.mxu0 %v182
      %270 = vmatpush1.msra.mxu0 %v181
      %271 = vmatprep.subr.mxu0 %v184
      %272 = vmatpush1.msra.mxu0 %v183
      %273 = vmatprep.subr.mxu0 %v186
      %274 = vmatpush1.msra.mxu0 %v185
      %275 = vmatprep.subr.mxu0 %v188
      %276 = vmatpush1.msra.mxu0 %v187
      %277 = vmatprep.subr.mxu0 %v190
      %278 = vmatpush1.msra.mxu0 %v189
      %279 = vmatprep.subr.mxu0 %v192
      %280 = vmatpush1.msra.mxu0 %v191
      %281 = vmatprep.subr.mxu0 %v194
      %282 = vmatpush1.msra.mxu0 %v193
      %283 = vmatprep.subr.mxu0 %v196
      %284 = vmatpush1.msra.mxu0 %v195
      %285 = vmatprep.subr.mxu0 %v198
      %286 = vmatpush1.msra.mxu0 %v197
      %287 = vmatprep.subr.mxu0 %v200
      %288 = vmatpush1.msra.mxu0 %v199
      %289 = vmatprep.subr.mxu0 %v202
      %290 = vmatpush1.msra.mxu0 %v201
      %291 = vmatprep.subr.mxu0 %v204
      %292 = vmatpush1.msra.mxu0 %v203
      %293 = vmatprep.subr.mxu0 %v206
      %294 = vmatpush1.msra.mxu0 %v205
      %295 = vmatprep.subr.mxu0 %v208
      %296 = vmatpush1.msra.mxu0 %v207
      %297 = vmatprep.subr.mxu0 %v210
      %298 = vmatpush1.msra.mxu0 %v209
      %299 = vmatprep.subr.mxu0 %v212
      %300 = vmatpush1.msra.mxu0 %v211
      %301 = vmatprep.subr.mxu0 %v214
      %302 = vmatpush1.msra.mxu0 %v213
      %303 = vmatprep.subr.mxu0 %v216
      %304 = vmatpush1.msra.mxu0 %v215
      %305 = vmatprep.subr.mxu0 %v218
      %306 = vmatpush1.msra.mxu0 %v217
      %307 = vmatprep.subr.mxu0 %v220
      %308 = vmatpush1.msra.mxu0 %v219
      %309 = vmatprep.subr.mxu0 %v222
      %310 = vmatpush1.msra.mxu0 %v221
      %311 = vmatprep.subr.mxu0 %v224
      %312 = vmatpush1.msra.mxu0 %v223
      %313 = vmatprep.subr.mxu0 %v226
      %314 = vmatpush1.msra.mxu0 %v225
      %315 = vmatprep.subr.mxu0 %v228
      %316 = vmatpush1.msra.mxu0 %v227
      %317 = vmatprep.subr.mxu0 %v230
      %318 = vmatpush1.msra.mxu0 %v229
      %319 = vmatprep.subr.mxu0 %v232
      %320 = vmatpush1.msra.mxu0 %v231
      %321 = vmatprep.subr.mxu0 %v234
      %322 = vmatpush1.msra.mxu0 %v233
      %323 = vmatprep.subr.mxu0 %v236
      %324 = vmatpush1.msra.mxu0 %v235
      %325 = vmatprep.subr.mxu0 %v238
      %326 = vmatpush1.msra.mxu0 %v237
      %327 = vmatprep.subr.mxu0 %v240
      %328 = vmatpush1.msra.mxu0 %v239
      %329 = vmatprep.subr.mxu0 %v242
      %330 = vmatpush1.msra.mxu0 %v241
      %331 = vmatprep.mubr.f32.mxu0 %v172
      %332 = vmatmul.mubr.f32.gmra.mrb[0].mxu0 %v171
      %v333 = vpop.f32.mrb[0].mxu0
      %v334 = vadd.f32 %v250, %v333
      %v335 = vpop.f32.mrb[0].mxu0
      %v336 = vadd.f32 %v250, %v335
      %337 = vmatprep.mubr.f32.mxu0 %v174
      %338 = vmatmul.mubr.f32.gmra.mrb[0].mxu0 %v173
      %v339 = vpop.f32.mrb[0].mxu0
      %v340 = vadd.f32 %v255, %v339
      %v341 = vpop.f32.mrb[0].mxu0
      %v342 = vadd.f32 %v255, %v341
      %343 = vmatprep.mubr.f32.mxu0 %v176
      %344 = vmatmul.mubr.f32.gmra.mrb[0].mxu0 %v175
      %v345 = vpop.f32.mrb[0].mxu0
      %v346 = vadd.f32 %v260, %v345
      %v347 = vpop.f32.mrb[0].mxu0
      %v348 = vadd.f32 %v260, %v347
      %349 = vmatprep.mubr.f32.mxu0 %v178
      %350 = vmatmul.mubr.f32.gmra.mrb[0].mxu0 %v177
      %v351 = vpop.f32.mrb[0].mxu0
      %v352 = vadd.f32 %v265, %v351
      %v353 = vpop.f32.mrb[0].mxu0
      %v354 = vadd.f32 %v265, %v353
      %355 = vdwg.mxu0
      %356 = vst [vmem:[%s170] sm:$0xff] %v334
      %357 = vst [vmem:[%s170 + $0x8] sm:$0xff] %v336
      %358 = vst [vmem:[%s170 + $0x10] sm:$0xff] %v340
      %359 = vst [vmem:[%s170 + $0x18] sm:$0xff] %v342
      %360 = vst [vmem:[%s170 + $0x20] sm:$0xff] %v346
      %361 = vst [vmem:[%s170 + $0x28] sm:$0xff] %v348
      %362 = vst [vmem:[%s170 + $0x30] sm:$0xff] %v352
      %363 = vst [vmem:[%s170 + $0x38] sm:$0xff] %v354
      %p364 = scmp.lt.s32.totalorder %s14, 1
      %s365 = scalar_select %p364, %s14, 1
      %s366 = smul.addr %s365, 8
      %s367 = smul.addr %s366, 8
      %s368 = scalar_lea.vmem %s3, %s367
      // Predicated region
      $region33: #{lifting_conv_forward.1} parent=31 // pred_check
        %p369 = pneg %p100
      $region34: #{lifting_conv_forward.1} parent=31 // pred_check_branch
        %371 = sbr.rel (%p369) target = $region36
      $region35: #{lifting_conv_forward.1} parent=31 // pred_region
        _
      $region36: #{lifting_conv_forward.1} parent=31 // pred_fallthru
        _
    $region32: #{lifting_conv_forward.1} parent=5 // pred_fallthru
      _
    %p372 = scmp.le.s32.totalorder 2, %s9
    // Predicated region
    $region37: #{lifting_conv_forward.1} parent=5 // pred_check
      %p373 = pneg %p372
    $region38: #{lifting_conv_forward.1} parent=5 // pred_check_branch
      %375 = sbr.rel (%p373) target = $region40
    $region39: #{lifting_conv_forward.1} parent=5 // pred_region
      %s376 = ssub.s32 %s9, 2
      // Predicated region
      $region41: #{lifting_conv_forward.1} parent=39 // pred_check
        %p377 = pneg %p106
      $region42: #{lifting_conv_forward.1} parent=39 // pred_check_branch
        %379 = sbr.rel (%p377) target = $region44
      $region43: #{lifting_conv_forward.1} parent=39 // pred_region
        %p380 = scmp.lt.s32.totalorder %s15, 1
        %s381 = scalar_select %p380, %s15, 1
        %s382 = smul.addr %s381, 8
        %s383 = smul.addr %s382, 8
        %s384 = scalar_lea.vmem %s3, %s383
      $region44: #{lifting_conv_forward.1} parent=39 // pred_fallthru
        _
    $region40: #{lifting_conv_forward.1} parent=5 // pred_fallthru
      _
  $region6: #{lifting_conv_forward.1} parent=0 // loop_footer
    %s13 = sadd.s32 1, %s9
  $region7: #{lifting_conv_forward.1} parent=0 // loop_footer_branch
    %8 = sbr.rel target = $region3
  $region8: #{lifting_conv_forward.1} parent=0 // loop_exit
    _

</llo_original>
